<compile_context>
chip_gen: v7x
topology: tpu7x:2x2x1
jax: 0.10.0
libtpu: 0.0.40
codegen_flags: <defaults>
</compile_context>

<pallas_src>
import functools
import math

import jax
import jax.numpy as jnp
from jax import lax
from jax.experimental import pallas as pl
from jax.experimental.pallas import tpu as pltpu


def _new_gelu(x):
    # NewGELUActivation (GPT-2 tanh approximation)
    c = math.sqrt(2.0 / math.pi)
    return 0.5 * x * (1.0 + jnp.tanh(c * (x + 0.044715 * x * x * x)))


def epinet5_kernel(x_ref, z_ref, w1x_ref, w1z_ref, b1_ref, w2_ref, b2_ref, o_ref, *, z_dim):
    # x_ref:  (TB, X)      batch-tiled activations
    # z_ref:  (TB, Z)      batch-tiled epistemic index
    # w1x_ref:(X, H)  w1z_ref:(Z, H)  b1_ref:(1, H)
    # w2_ref: (H, 2Z) b2_ref:(1, 2Z)              (all VMEM-resident, constant index_map)
    # o_ref:  (TB, 2)      final output block
    x = x_ref[...]
    z = z_ref[...]

    # Layer 1: split-K matmul (x@W1x + z@W1z) + bias + NewGELU.
    h = jnp.dot(x, w1x_ref[...], preferred_element_type=jnp.float32)
    h = h + jnp.dot(z, w1z_ref[...], preferred_element_type=jnp.float32)
    h = _new_gelu(h + b1_ref[...])

    # Layer 2.
    o = jnp.dot(h, w2_ref[...], preferred_element_type=jnp.float32) + b2_ref[...]  # (TB, 2Z)

    # out[b, k] = sum_j o[b, k*Z + j] * z[b, j]  -- VPU mul + lane reduction (slack units).
    out0 = jnp.sum(o[:, :z_dim] * z, axis=-1, keepdims=True)   # (TB, 1)
    out1 = jnp.sum(o[:, z_dim:] * z, axis=-1, keepdims=True)   # (TB, 1)

    col = lax.broadcasted_iota(jnp.int32, o_ref.shape, 1)
    o_ref[...] = jnp.where(col == 0, out0, out1)


def _pick_batch_tile(batch, block_b):
    """Return (tb, padded_batch).

    Prefers a tile that divides the 8-rounded batch (no jnp.pad pass over the
    activations) and, when the batch allows it, keeps >= 2 grid steps so the
    'parallel' batch axis can be sharded across v7x's two TensorCores."""
    bp8 = ((batch + 7) // 8) * 8
    cap = max(8, min((block_b // 8) * 8, bp8))
    if bp8 >= 16:
        cap = min(cap, max(8, ((bp8 // 2) // 8) * 8))   # keep >= 2 grid steps
    best = 8
    for d in range(8, cap + 1, 8):
        if bp8 % d == 0:
            best = d
    if 4 * best >= cap:
        return best, bp8
    # Rare fallback (no reasonable divisor): pad to a multiple of the cap.
    return cap, ((bp8 + cap - 1) // cap) * cap


def epinet5_forward(x_til, z, w1, b1, w2, b2, *, block_b=1024):
    B, x_dim = x_til.shape
    z_dim = z.shape[1]
    K, H = w1.shape
    assert K == x_dim + z_dim
    n_out = w2.shape[1]
    assert n_out == 2 * z_dim

    x_til = x_til.astype(jnp.float32)
    z = z.astype(jnp.float32)
    # Pre-split W1 once (weights are tiny) so the kernel never needs a concatenated
    # [x_til, z] activation stream.
    w1x = w1[:x_dim].astype(jnp.float32)     # (X, H)
    w1z = w1[x_dim:].astype(jnp.float32)     # (Z, H)
    b1 = b1.reshape(1, H).astype(jnp.float32)
    w2 = w2.astype(jnp.float32)
    b2 = b2.reshape(1, n_out).astype(jnp.float32)

    tb, bp = _pick_batch_tile(B, block_b)
    if bp != B:
        x_til = jnp.pad(x_til, ((0, bp - B), (0, 0)))
        z = jnp.pad(z, ((0, bp - B), (0, 0)))

    kernel = functools.partial(epinet5_kernel, z_dim=z_dim)

    flops = 2 * bp * (x_dim * H + z_dim * H + H * n_out + n_out)
    bytes_accessed = 4 * (bp * (x_dim + z_dim + 2)
                          + x_dim * H + z_dim * H + H + H * n_out + n_out)

    out = pl.pallas_call(
        kernel,
        out_shape=jax.ShapeDtypeStruct((bp, 2), jnp.float32),
        grid_spec=pltpu.PrefetchScalarGridSpec(
            num_scalar_prefetch=0,
            grid=(bp // tb,),
            in_specs=[
                pl.BlockSpec((tb, x_dim), lambda i: (i, 0)),     # x_til, batch-tiled
                pl.BlockSpec((tb, z_dim), lambda i: (i, 0)),     # z, batch-tiled
                pl.BlockSpec((x_dim, H), lambda i: (0, 0)),      # W1x, VMEM-resident
                pl.BlockSpec((z_dim, H), lambda i: (0, 0)),      # W1z, VMEM-resident
                pl.BlockSpec((1, H), lambda i: (0, 0)),          # b1
                pl.BlockSpec((H, n_out), lambda i: (0, 0)),      # W2, VMEM-resident
                pl.BlockSpec((1, n_out), lambda i: (0, 0)),      # b2
            ],
            out_specs=pl.BlockSpec((tb, 2), lambda i: (i, 0)),
        ),
        compiler_params=pltpu.CompilerParams(
            dimension_semantics=("parallel",),   # megacore sharding on v7x
        ),
        cost_estimate=pl.CostEstimate(
            flops=flops, transcendentals=bp * H, bytes_accessed=bytes_accessed),
    )(x_til, z, w1x, w1z, b1, w2, b2)

    return out if bp == B else out[:B]


def epinet5_reference(x_til, z, w1, b1, w2, b2):
    B = x_til.shape[0]
    z_dim = z.shape[1]
    inp = jnp.concatenate([x_til, z], axis=1)
    h = _new_gelu(jnp.dot(inp, w1, precision=lax.Precision.HIGHEST) + b1)
    o = jnp.dot(h, w2, precision=lax.Precision.HIGHEST) + b2
    o = o.reshape(B, 2, z_dim)
    return jnp.einsum("bkz,bz->bk", o, z, precision=lax.Precision.HIGHEST)


if __name__ == "__main__":
    # Small, TPU-friendly shapes consistent with the module's forward
    # (module defaults are x_til=768, hidden=256, z=32; scaled down here).
    B = 64
    X_TIL_DIM = 128
    Z_DIM = 32
    HIDDEN = 128

    key = jax.random.PRNGKey(0)
    kx, kz, kw1, kb1, kw2, kb2 = jax.random.split(key, 6)

    x_til = jax.random.normal(kx, (B, X_TIL_DIM), dtype=jnp.float32)

    # z ~ N(0, 1/sqrt(z_dim)) — generated deterministically in the wrapper (glue;
    # matches torch.randn(...) / sqrt(z_dim) semantics with a fixed seed).
    z = jax.random.normal(kz, (B, Z_DIM), dtype=jnp.float32) / jnp.sqrt(jnp.float32(Z_DIM))

    # Deterministic nn.Linear-style init (uniform(-1/sqrt(fan_in), 1/sqrt(fan_in))),
    # weights stored transposed vs. nn.Linear: W1 (X+Z, H), W2 (H, 2Z).
    fan1 = X_TIL_DIM + Z_DIM
    w1 = jax.random.uniform(kw1, (fan1, HIDDEN), jnp.float32,
                            -1.0 / math.sqrt(fan1), 1.0 / math.sqrt(fan1))
    b1 = jax.random.uniform(kb1, (1, HIDDEN), jnp.float32,
                            -1.0 / math.sqrt(fan1), 1.0 / math.sqrt(fan1))
    fan2 = HIDDEN
    w2 = jax.random.uniform(kw2, (fan2, 2 * Z_DIM), jnp.float32,
                            -1.0 / math.sqrt(fan2), 1.0 / math.sqrt(fan2))
    b2 = jax.random.uniform(kb2, (1, 2 * Z_DIM), jnp.float32,
                            -1.0 / math.sqrt(fan2), 1.0 / math.sqrt(fan2))

    out = epinet5_forward(x_til, z, w1, b1, w2, b2)
    out = jax.block_until_ready(out)

    ref = epinet5_reference(x_til, z, w1, b1, w2, b2)
    assert out.shape == (B, 2), out.shape
    assert jnp.allclose(out, ref, atol=1e-4, rtol=1e-4), (out, ref)

    print("KERNEL_OK")
</pallas_src>

<mosaic_0001>
module attributes {stable_mosaic.version = 11 : i64} {
  func.func @epinet5_kernel(%arg0: i32, %arg1: memref<32x128xf32, #tpu.memory_space<vmem>>, %arg2: memref<32x32xf32, #tpu.memory_space<vmem>>, %arg3: memref<128x128xf32, #tpu.memory_space<vmem>>, %arg4: memref<32x128xf32, #tpu.memory_space<vmem>>, %arg5: memref<1x128xf32, #tpu.memory_space<vmem>>, %arg6: memref<128x64xf32, #tpu.memory_space<vmem>>, %arg7: memref<1x64xf32, #tpu.memory_space<vmem>>, %arg8: memref<32x2xf32, #tpu.memory_space<vmem>>) attributes {dimension_semantics = [#tpu.dimension_semantics<parallel>], iteration_bounds = array<i64: 2>, scalar_prefetch = 0 : i64, scratch_operands = 0 : i64, tpu.core_type = #tpu.core_type<tc>, window_params = [{transform_indices = @transform_0, window_bounds = array<i64: 32, 128>}, {transform_indices = @transform_1, window_bounds = array<i64: 32, 32>}, {pipeline_mode = #tpu.pipeline_mode<synchronous>, transform_indices = @transform_2, window_bounds = array<i64: 128, 128>}, {pipeline_mode = #tpu.pipeline_mode<synchronous>, transform_indices = @transform_3, window_bounds = array<i64: 32, 128>}, {pipeline_mode = #tpu.pipeline_mode<synchronous>, transform_indices = @transform_4, window_bounds = array<i64: 1, 128>}, {pipeline_mode = #tpu.pipeline_mode<synchronous>, transform_indices = @transform_5, window_bounds = array<i64: 128, 64>}, {pipeline_mode = #tpu.pipeline_mode<synchronous>, transform_indices = @transform_6, window_bounds = array<i64: 1, 64>}, {transform_indices = @transform_7, window_bounds = array<i64: 32, 2>}]} {
    %c0 = arith.constant 0 : index
    %c0_0 = arith.constant 0 : index
    %0 = vector.load %arg1[%c0, %c0_0] : memref<32x128xf32, #tpu.memory_space<vmem>>, vector<32x128xf32>
    %c0_1 = arith.constant 0 : index
    %c0_2 = arith.constant 0 : index
    %1 = vector.load %arg2[%c0_1, %c0_2] : memref<32x32xf32, #tpu.memory_space<vmem>>, vector<32x32xf32>
    %c0_3 = arith.constant 0 : index
    %c0_4 = arith.constant 0 : index
    %2 = vector.load %arg3[%c0_3, %c0_4] : memref<128x128xf32, #tpu.memory_space<vmem>>, vector<128x128xf32>
    %cst = arith.constant dense<0.000000e+00> : vector<32x128xf32>
    %3 = tpu.matmul %0, %2, %cst {dimension_numbers = #tpu.dot_dimension_numbers<[1], [0], [0], [1], [0, 0, 1, 1], [], []>} : vector<32x128xf32>, vector<128x128xf32>, vector<32x128xf32> -> vector<32x128xf32>
    %c0_5 = arith.constant 0 : index
    %c0_6 = arith.constant 0 : index
    %4 = vector.load %arg4[%c0_5, %c0_6] : memref<32x128xf32, #tpu.memory_space<vmem>>, vector<32x128xf32>
    %cst_7 = arith.constant dense<0.000000e+00> : vector<32x128xf32>
    %5 = tpu.matmul %1, %4, %cst_7 {dimension_numbers = #tpu.dot_dimension_numbers<[1], [0], [0], [1], [0, 0, 1, 1], [], []>} : vector<32x32xf32>, vector<32x128xf32>, vector<32x128xf32> -> vector<32x128xf32>
    %6 = arith.addf %3, %5 : vector<32x128xf32>
    %c0_8 = arith.constant 0 : index
    %c0_9 = arith.constant 0 : index
    %7 = vector.load %arg5[%c0_8, %c0_9] : memref<1x128xf32, #tpu.memory_space<vmem>>, vector<1x128xf32>
    %8 = vector.broadcast %7 : vector<1x128xf32> to vector<32x128xf32>
    %9 = arith.addf %6, %8 : vector<32x128xf32>
    %cst_10 = arith.constant 5.000000e-01 : f32
    %10 = vector.broadcast %cst_10 : f32 to vector<32x128xf32>
    %11 = arith.mulf %10, %9 : vector<32x128xf32>
    %cst_11 = arith.constant 4.471500e-02 : f32
    %12 = vector.broadcast %cst_11 : f32 to vector<32x128xf32>
    %13 = arith.mulf %12, %9 : vector<32x128xf32>
    %14 = arith.mulf %13, %9 : vector<32x128xf32>
    %15 = arith.mulf %14, %9 : vector<32x128xf32>
    %16 = arith.addf %9, %15 : vector<32x128xf32>
    %cst_12 = arith.constant 0.797884583 : f32
    %17 = vector.broadcast %cst_12 : f32 to vector<32x128xf32>
    %18 = arith.mulf %17, %16 : vector<32x128xf32>
    %19 = math.tanh %18 : vector<32x128xf32>
    %cst_13 = arith.constant 1.000000e+00 : f32
    %20 = vector.broadcast %cst_13 : f32 to vector<32x128xf32>
    %21 = arith.addf %20, %19 : vector<32x128xf32>
    %22 = arith.mulf %11, %21 : vector<32x128xf32>
    %c0_14 = arith.constant 0 : index
    %c0_15 = arith.constant 0 : index
    %23 = vector.load %arg6[%c0_14, %c0_15] : memref<128x64xf32, #tpu.memory_space<vmem>>, vector<128x64xf32>
    %cst_16 = arith.constant dense<0.000000e+00> : vector<32x64xf32>
    %24 = tpu.matmul %22, %23, %cst_16 {dimension_numbers = #tpu.dot_dimension_numbers<[1], [0], [0], [1], [0, 0, 1, 1], [], []>} : vector<32x128xf32>, vector<128x64xf32>, vector<32x64xf32> -> vector<32x64xf32>
    %c0_17 = arith.constant 0 : index
    %c0_18 = arith.constant 0 : index
    %25 = vector.load %arg7[%c0_17, %c0_18] : memref<1x64xf32, #tpu.memory_space<vmem>>, vector<1x64xf32>
    %26 = vector.broadcast %25 : vector<1x64xf32> to vector<32x64xf32>
    %27 = arith.addf %24, %26 : vector<32x64xf32>
    %28 = vector.extract_strided_slice %27 {offsets = [0, 0], sizes = [32, 32], strides = [1, 1]} : vector<32x64xf32> to vector<32x32xf32>
    %29 = arith.mulf %28, %1 : vector<32x32xf32>
    %cst_19 = arith.constant dense<0.000000e+00> : vector<32xf32>
    %30 = vector.multi_reduction <add>, %29, %cst_19 [1] : vector<32x32xf32> to vector<32xf32>
    %31 = vector.shape_cast %30 : vector<32xf32> to vector<32x1xf32>
    %32 = vector.extract_strided_slice %27 {offsets = [0, 32], sizes = [32, 32], strides = [1, 1]} : vector<32x64xf32> to vector<32x32xf32>
    %33 = arith.mulf %32, %1 : vector<32x32xf32>
    %cst_20 = arith.constant dense<0.000000e+00> : vector<32xf32>
    %34 = vector.multi_reduction <add>, %33, %cst_20 [1] : vector<32x32xf32> to vector<32xf32>
    %35 = vector.shape_cast %34 : vector<32xf32> to vector<32x1xf32>
    %36 = tpu.iota {dimensions = array<i32: 1>} : vector<32x2xi32>
    %c0_i32 = arith.constant 0 : i32
    %37 = vector.broadcast %c0_i32 : i32 to vector<32x2xi32>
    %38 = arith.cmpi eq, %36, %37 : vector<32x2xi32>
    %39 = vector.shape_cast %31 : vector<32x1xf32> to vector<32x1xf32>
    %40 = vector.broadcast %39 : vector<32x1xf32> to vector<32x2xf32>
    %41 = vector.shape_cast %35 : vector<32x1xf32> to vector<32x1xf32>
    %42 = vector.broadcast %41 : vector<32x1xf32> to vector<32x2xf32>
    %43 = arith.select %38, %40, %42 : vector<32x2xi1>, vector<32x2xf32>
    %c0_21 = arith.constant 0 : index
    %c0_22 = arith.constant 0 : index
    %44 = vector.load %arg8[%c0_21, %c0_22] : memref<32x2xf32, #tpu.memory_space<vmem>>, vector<32x2xf32>
    tpu.vector_store %arg8[%c0_21, %c0_22], %43 {strides = array<i32>} : memref<32x2xf32, #tpu.memory_space<vmem>>, vector<32x2xf32>,
    return
  }
  func.func @transform_0(%arg0: i32) -> (i32, i32) {
    %c0_i32 = arith.constant 0 : i32
    %c0_i32_0 = arith.constant 0 : i32
    return %arg0, %c0_i32 : i32, i32
  }
  func.func @transform_1(%arg0: i32) -> (i32, i32) {
    %c0_i32 = arith.constant 0 : i32
    %c0_i32_0 = arith.constant 0 : i32
    return %arg0, %c0_i32 : i32, i32
  }
  func.func @transform_2(%arg0: i32) -> (i32, i32) {
    %c0_i32 = arith.constant 0 : i32
    %c0_i32_0 = arith.constant 0 : i32
    %c0_i32_1 = arith.constant 0 : i32
    return %c0_i32, %c0_i32_0 : i32, i32
  }
  func.func @transform_3(%arg0: i32) -> (i32, i32) {
    %c0_i32 = arith.constant 0 : i32
    %c0_i32_0 = arith.constant 0 : i32
    %c0_i32_1 = arith.constant 0 : i32
    return %c0_i32, %c0_i32_0 : i32, i32
  }
  func.func @transform_4(%arg0: i32) -> (i32, i32) {
    %c0_i32 = arith.constant 0 : i32
    %c0_i32_0 = arith.constant 0 : i32
    %c0_i32_1 = arith.constant 0 : i32
    return %c0_i32, %c0_i32_0 : i32, i32
  }
  func.func @transform_5(%arg0: i32) -> (i32, i32) {
    %c0_i32 = arith.constant 0 : i32
    %c0_i32_0 = arith.constant 0 : i32
    %c0_i32_1 = arith.constant 0 : i32
    return %c0_i32, %c0_i32_0 : i32, i32
  }
  func.func @transform_6(%arg0: i32) -> (i32, i32) {
    %c0_i32 = arith.constant 0 : i32
    %c0_i32_0 = arith.constant 0 : i32
    %c0_i32_1 = arith.constant 0 : i32
    return %c0_i32, %c0_i32_0 : i32, i32
  }
  func.func @transform_7(%arg0: i32) -> (i32, i32) {
    %c0_i32 = arith.constant 0 : i32
    %c0_i32_0 = arith.constant 0 : i32
    return %arg0, %c0_i32 : i32, i32
  }
}

</mosaic_0001>

<llo_original>
// kernel: tpu_custom_call.1
$region0: #{tpu_custom_call.1}
  #allocation0 [shape = 'u32[]', space=smem, size = 0x4, offset = 0x4, fixed_abs, tag = 'smem constant byte address 0x4 - core index']
  #allocation1 [shape = 'u32[144,128]{1,0:T(1,128)}', space=vmem, size = 0x12000, scoped, tag = 'internal scratch']
  %s0 = inlined_call_operand.vmem [shape: f32[64,128], index: 0, kind: input, shape index: {}]
  %s1 = inlined_call_operand.vmem [shape: f32[64,32], index: 1, kind: input, shape index: {}]
  %s2 = inlined_call_operand.vmem [shape: f32[128,128], index: 2, kind: input, shape index: {}]
  %s3 = inlined_call_operand.vmem [shape: f32[32,128], index: 3, kind: input, shape index: {}]
  %s4 = inlined_call_operand.vmem [shape: f32[1,128], index: 4, kind: input, shape index: {}]
  %s5 = inlined_call_operand.vmem [shape: f32[128,64], index: 5, kind: input, shape index: {}]
  %s6 = inlined_call_operand.vmem [shape: f32[1,64], index: 6, kind: input, shape index: {}]
  %s7 = inlined_call_operand.vmem [shape: f32[64,2], index: 7, kind: output, shape index: {}]
  %s8 = sld [smem:[#allocation0]]
  $region61: #{tpu_custom_call.1} parent=0
    _
  %s10 = ssub.s32 1, %s8
  %s11 = scalar_select 0, %s10, %s8
  loop: start=0, step=1, limit=4
  $region2: #{tpu_custom_call.1} parent=0 // loop_pre_header
    _
  $region3: #{tpu_custom_call.1} parent=0 // loop_header
    %s13 = sphi 0, %s17
    %p14 = scmp.ge.s32.totalorder %s13, 4
    %s23 = sphi 0, %s25
    %s26 = sphi 0, %s23
    %s27 = sphi 0, %s26
    %s43 = sphi 0, %s27
    %s49 = sphi 0, %s51
    %s52 = sphi 0, %s49
    %s53 = sphi 0, %s52
    %s69 = sphi 0, %s53
    %s73 = sphi 0, %s73
    %s75 = sphi 0, %s73
    %s76 = sphi 0, %s75
    %s90 = sphi 0, %s76
    %s94 = sphi 0, %s94
    %s96 = sphi 0, %s94
    %s97 = sphi 0, %s96
    %s111 = sphi 0, %s97
    %s115 = sphi 0, %s115
    %s117 = sphi 0, %s115
    %s118 = sphi 0, %s117
    %s132 = sphi 0, %s118
    %s136 = sphi 0, %s136
    %s138 = sphi 0, %s136
    %s139 = sphi 0, %s138
    %s153 = sphi 0, %s139
    %s157 = sphi 0, %s157
    %s159 = sphi 0, %s157
    %s160 = sphi 0, %s159
    %s174 = sphi 0, %s160
    %s180 = sphi 0, %s182
    %s183 = sphi 0, %s180
    %s184 = sphi 0, %s183
    %s200 = sphi 0, %s184
  $region4: #{tpu_custom_call.1} parent=0 // loop_header_branch
    %16 = sbr.rel (%p14) target = $region8
  $region5: #{tpu_custom_call.1} parent=0 // loop_body
    %s18 = ssub.s32 %s13, 1
    %s19 = ssub.s32 %s13, 2
    %s20 = sadd.s32 %s13, 1
    %s21 = ssub.s32 %s13, %s20
    %p22 = scmp.eq.s32.totalorder %s21, 0
    %s24 = sadd.s32 %s23, 1
    %s25 = scalar_select %p22, %s23, %s24
    %p28 = pneg %p22
    %p29 = scmp.eq.s32.totalorder %s13, 1
    %p30 = por %p28, %p29
    %p31 = scmp.ne.s32.totalorder %s23, %s26
    %p32 = scmp.eq.s32.totalorder %s13, 0
    %p33 = por %p31, %p32
    %p34 = scmp.ne.s32.totalorder %s23, %s26
    %p35 = scmp.eq.s32.totalorder %s18, 1
    %p36 = por %p34, %p35
    %p37 = scmp.ne.s32.totalorder %s26, %s27
    %p38 = scmp.eq.s32.totalorder %s18, 0
    %p39 = por %p37, %p38
    %p40 = scmp.ne.s32.totalorder %s26, %s27
    %p41 = scmp.eq.s32.totalorder %s19, 1
    %p42 = por %p40, %p41
    %p44 = scmp.ne.s32.totalorder %s27, %s43
    %p45 = scmp.eq.s32.totalorder %s19, 0
    %p46 = por %p44, %p45
    %s47 = ssub.s32 %s13, %s20
    %p48 = scmp.eq.s32.totalorder %s47, 0
    %s50 = sadd.s32 %s49, 1
    %s51 = scalar_select %p48, %s49, %s50
    %p54 = pneg %p48
    %p55 = scmp.eq.s32.totalorder %s13, 1
    %p56 = por %p54, %p55
    %p57 = scmp.ne.s32.totalorder %s49, %s52
    %p58 = scmp.eq.s32.totalorder %s13, 0
    %p59 = por %p57, %p58
    %p60 = scmp.ne.s32.totalorder %s49, %s52
    %p61 = scmp.eq.s32.totalorder %s18, 1
    %p62 = por %p60, %p61
    %p63 = scmp.ne.s32.totalorder %s52, %s53
    %p64 = scmp.eq.s32.totalorder %s18, 0
    %p65 = por %p63, %p64
    %p66 = scmp.ne.s32.totalorder %s52, %s53
    %p67 = scmp.eq.s32.totalorder %s19, 1
    %p68 = por %p66, %p67
    %p70 = scmp.ne.s32.totalorder %s53, %s69
    %p71 = scmp.eq.s32.totalorder %s19, 0
    %p72 = por %p70, %p71
    %s74 = sadd.s32 %s73, 1
    %p77 = scmp.eq.s32.totalorder %s13, 1
    %p78 = scmp.ne.s32.totalorder %s73, %s75
    %p79 = scmp.eq.s32.totalorder %s13, 0
    %p80 = por %p78, %p79
    %p81 = scmp.ne.s32.totalorder %s73, %s75
    %p82 = scmp.eq.s32.totalorder %s18, 1
    %p83 = por %p81, %p82
    %p84 = scmp.ne.s32.totalorder %s75, %s76
    %p85 = scmp.eq.s32.totalorder %s18, 0
    %p86 = por %p84, %p85
    %p87 = scmp.ne.s32.totalorder %s75, %s76
    %p88 = scmp.eq.s32.totalorder %s19, 1
    %p89 = por %p87, %p88
    %p91 = scmp.ne.s32.totalorder %s76, %s90
    %p92 = scmp.eq.s32.totalorder %s19, 0
    %p93 = por %p91, %p92
    %s95 = sadd.s32 %s94, 1
    %p98 = scmp.eq.s32.totalorder %s13, 1
    %p99 = scmp.ne.s32.totalorder %s94, %s96
    %p100 = scmp.eq.s32.totalorder %s13, 0
    %p101 = por %p99, %p100
    %p102 = scmp.ne.s32.totalorder %s94, %s96
    %p103 = scmp.eq.s32.totalorder %s18, 1
    %p104 = por %p102, %p103
    %p105 = scmp.ne.s32.totalorder %s96, %s97
    %p106 = scmp.eq.s32.totalorder %s18, 0
    %p107 = por %p105, %p106
    %p108 = scmp.ne.s32.totalorder %s96, %s97
    %p109 = scmp.eq.s32.totalorder %s19, 1
    %p110 = por %p108, %p109
    %p112 = scmp.ne.s32.totalorder %s97, %s111
    %p113 = scmp.eq.s32.totalorder %s19, 0
    %p114 = por %p112, %p113
    %s116 = sadd.s32 %s115, 1
    %p119 = scmp.eq.s32.totalorder %s13, 1
    %p120 = scmp.ne.s32.totalorder %s115, %s117
    %p121 = scmp.eq.s32.totalorder %s13, 0
    %p122 = por %p120, %p121
    %p123 = scmp.ne.s32.totalorder %s115, %s117
    %p124 = scmp.eq.s32.totalorder %s18, 1
    %p125 = por %p123, %p124
    %p126 = scmp.ne.s32.totalorder %s117, %s118
    %p127 = scmp.eq.s32.totalorder %s18, 0
    %p128 = por %p126, %p127
    %p129 = scmp.ne.s32.totalorder %s117, %s118
    %p130 = scmp.eq.s32.totalorder %s19, 1
    %p131 = por %p129, %p130
    %p133 = scmp.ne.s32.totalorder %s118, %s132
    %p134 = scmp.eq.s32.totalorder %s19, 0
    %p135 = por %p133, %p134
    %s137 = sadd.s32 %s136, 1
    %p140 = scmp.eq.s32.totalorder %s13, 1
    %p141 = scmp.ne.s32.totalorder %s136, %s138
    %p142 = scmp.eq.s32.totalorder %s13, 0
    %p143 = por %p141, %p142
    %p144 = scmp.ne.s32.totalorder %s136, %s138
    %p145 = scmp.eq.s32.totalorder %s18, 1
    %p146 = por %p144, %p145
    %p147 = scmp.ne.s32.totalorder %s138, %s139
    %p148 = scmp.eq.s32.totalorder %s18, 0
    %p149 = por %p147, %p148
    %p150 = scmp.ne.s32.totalorder %s138, %s139
    %p151 = scmp.eq.s32.totalorder %s19, 1
    %p152 = por %p150, %p151
    %p154 = scmp.ne.s32.totalorder %s139, %s153
    %p155 = scmp.eq.s32.totalorder %s19, 0
    %p156 = por %p154, %p155
    %s158 = sadd.s32 %s157, 1
    %p161 = scmp.eq.s32.totalorder %s13, 1
    %p162 = scmp.ne.s32.totalorder %s157, %s159
    %p163 = scmp.eq.s32.totalorder %s13, 0
    %p164 = por %p162, %p163
    %p165 = scmp.ne.s32.totalorder %s157, %s159
    %p166 = scmp.eq.s32.totalorder %s18, 1
    %p167 = por %p165, %p166
    %p168 = scmp.ne.s32.totalorder %s159, %s160
    %p169 = scmp.eq.s32.totalorder %s18, 0
    %p170 = por %p168, %p169
    %p171 = scmp.ne.s32.totalorder %s159, %s160
    %p172 = scmp.eq.s32.totalorder %s19, 1
    %p173 = por %p171, %p172
    %p175 = scmp.ne.s32.totalorder %s160, %s174
    %p176 = scmp.eq.s32.totalorder %s19, 0
    %p177 = por %p175, %p176
    %s178 = ssub.s32 %s13, %s20
    %p179 = scmp.eq.s32.totalorder %s178, 0
    %s181 = sadd.s32 %s180, 1
    %s182 = scalar_select %p179, %s180, %s181
    %p185 = pneg %p179
    %p186 = scmp.eq.s32.totalorder %s13, 1
    %p187 = por %p185, %p186
    %p188 = scmp.ne.s32.totalorder %s180, %s183
    %p189 = scmp.eq.s32.totalorder %s13, 0
    %p190 = por %p188, %p189
    %p191 = scmp.ne.s32.totalorder %s180, %s183
    %p192 = scmp.eq.s32.totalorder %s18, 1
    %p193 = por %p191, %p192
    %p194 = scmp.ne.s32.totalorder %s183, %s184
    %p195 = scmp.eq.s32.totalorder %s18, 0
    %p196 = por %p194, %p195
    %p197 = scmp.ne.s32.totalorder %s183, %s184
    %p198 = scmp.eq.s32.totalorder %s19, 1
    %p199 = por %p197, %p198
    %p201 = scmp.ne.s32.totalorder %s184, %s200
    %p202 = scmp.eq.s32.totalorder %s19, 0
    %p203 = por %p201, %p202
    %p204 = scmp.le.s32.totalorder 1, %s13
    %p205 = scmp.lt.s32.totalorder %s13, 3
    %p206 = pnand %p204, %p205
    %p207 = pneg %p206
    // Predicated region
    $region9: #{tpu_custom_call.1} parent=5 // pred_check
      _
    $region10: #{tpu_custom_call.1} parent=5 // pred_check_branch
      %209 = sbr.rel (%p206) target = $region12
    $region11: #{tpu_custom_call.1} parent=5 // pred_region
      %s210 = ssub.s32 %s13, 1
      // Predicated region
      $region13: #{tpu_custom_call.1} parent=11 // pred_check
        %p211 = pneg %p86
      $region14: #{tpu_custom_call.1} parent=11 // pred_check_branch
        %213 = sbr.rel (%p211) target = $region16
      $region15: #{tpu_custom_call.1} parent=11 // pred_region
        _
      $region16: #{tpu_custom_call.1} parent=11 // pred_fallthru
        _
      // Predicated region
      $region17: #{tpu_custom_call.1} parent=11 // pred_check
        %p214 = pneg %p107
      $region18: #{tpu_custom_call.1} parent=11 // pred_check_branch
        %216 = sbr.rel (%p214) target = $region20
      $region19: #{tpu_custom_call.1} parent=11 // pred_region
        _
      $region20: #{tpu_custom_call.1} parent=11 // pred_fallthru
        _
      // Predicated region
      $region21: #{tpu_custom_call.1} parent=11 // pred_check
        %p217 = pneg %p128
      $region22: #{tpu_custom_call.1} parent=11 // pred_check_branch
        %219 = sbr.rel (%p217) target = $region24
      $region23: #{tpu_custom_call.1} parent=11 // pred_region
        _
      $region24: #{tpu_custom_call.1} parent=11 // pred_fallthru
        _
      // Predicated region
      $region25: #{tpu_custom_call.1} parent=11 // pred_check
        %p220 = pneg %p149
      $region26: #{tpu_custom_call.1} parent=11 // pred_check_branch
        %222 = sbr.rel (%p220) target = $region28
      $region27: #{tpu_custom_call.1} parent=11 // pred_region
        _
      $region28: #{tpu_custom_call.1} parent=11 // pred_fallthru
        _
      // Predicated region
      $region29: #{tpu_custom_call.1} parent=11 // pred_check
        %p223 = pneg %p170
      $region30: #{tpu_custom_call.1} parent=11 // pred_check_branch
        %225 = sbr.rel (%p223) target = $region32
      $region31: #{tpu_custom_call.1} parent=11 // pred_region
        _
      $region32: #{tpu_custom_call.1} parent=11 // pred_fallthru
        _
    $region12: #{tpu_custom_call.1} parent=5 // pred_fallthru
      _
    %p226 = scmp.lt.s32.totalorder %s13, 2
    // Predicated region
    $region33: #{tpu_custom_call.1} parent=5 // pred_check
      %p227 = pneg %p226
    $region34: #{tpu_custom_call.1} parent=5 // pred_check_branch
      %229 = sbr.rel (%p227) target = $region36
    $region35: #{tpu_custom_call.1} parent=5 // pred_region
      // Predicated region
      $region37: #{tpu_custom_call.1} parent=35 // pred_check
        %p230 = pneg %p33
      $region38: #{tpu_custom_call.1} parent=35 // pred_check_branch
        %232 = sbr.rel (%p230) target = $region40
      $region39: #{tpu_custom_call.1} parent=35 // pred_region
        %s233 = smul.u32 4, %s13
        %p234 = scmp.lt.s32.totalorder %s233, 7
        %s235 = scalar_select %p234, %s233, 7
        %s236 = smul.addr %s235, 8
        %s237 = scalar_lea.vmem %s0, %s236
        %s238 = smul.u32 4, %s13
      $region40: #{tpu_custom_call.1} parent=35 // pred_fallthru
        _
      // Predicated region
      $region41: #{tpu_custom_call.1} parent=35 // pred_check
        %p239 = pneg %p59
      $region42: #{tpu_custom_call.1} parent=35 // pred_check_branch
        %241 = sbr.rel (%p239) target = $region44
      $region43: #{tpu_custom_call.1} parent=35 // pred_region
        %s242 = smul.u32 4, %s13
        %p243 = scmp.lt.s32.totalorder %s242, 7
        %s244 = scalar_select %p243, %s242, 7
        %s245 = smul.addr %s244, 8
        %s246 = scalar_lea.vmem %s1, %s245
        %s247 = smul.u32 4, %s13
      $region44: #{tpu_custom_call.1} parent=35 // pred_fallthru
        _
    $region36: #{tpu_custom_call.1} parent=5 // pred_fallthru
      _
    %p248 = scmp.le.s32.totalorder 1, %s13
    %p249 = scmp.lt.s32.totalorder %s13, 3
    %p250 = pnand %p248, %p249
    %p251 = pneg %p250
    // Predicated region
    $region45: #{tpu_custom_call.1} parent=5 // pred_check
      _
    $region46: #{tpu_custom_call.1} parent=5 // pred_check_branch
      %253 = sbr.rel (%p250) target = $region48
    $region47: #{tpu_custom_call.1} parent=5 // pred_region
      %s254 = ssub.s32 %s13, 1
      %s255 = smul.u32 4, %s18
      %p256 = scmp.lt.s32.totalorder %s255, 7
      %s257 = scalar_select %p256, %s255, 7
      %s258 = smul.addr %s257, 8
      %s259 = scalar_lea.vmem %s0, %s258
      %p260 = pneg %p39
      %p261 = pneg %p36
      %s262 = smul.u32 4, %s18
      %p263 = scmp.lt.s32.totalorder %s262, 7
      %s264 = scalar_select %p263, %s262, 7
      %s265 = smul.addr %s264, 8
      %s266 = scalar_lea.vmem %s1, %s265
      %p267 = pneg %p65
      %p268 = pneg %p62
      %p269 = pneg %p86
      %p270 = pneg %p83
      %p271 = pneg %p107
      %p272 = pneg %p104
      %p273 = pneg %p128
      %p274 = pneg %p125
      %p275 = pneg %p149
      %p276 = pneg %p146
      %p277 = pneg %p170
      %p278 = pneg %p167
      %p279 = pneg %p196
      %p280 = pneg %p193
      %s281 = smul.u32 4, %s18
      %p282 = scmp.lt.s32.totalorder %s281, 7
      %s283 = scalar_select %p282, %s281, 7
      %s284 = smul.addr %s283, 8
      %s285 = scalar_lea.vmem %s7, %s284
      %s286 = smul.u32 4, %s18
      %p287 = scmp.lt.s32.totalorder %s286, 7
      %s288 = scalar_select %p287, %s286, 7
      %s289 = smul.addr %s288, 8
      %s290 = scalar_lea.vmem %s0, %s289
      %s291 = smul.u32 4, %s18
      %s292 = smul.u32 4, %s18
      %p293 = scmp.lt.s32.totalorder %s292, 7
      %s294 = scalar_select %p293, %s292, 7
      %s295 = smul.addr %s294, 8
      %s296 = scalar_lea.vmem %s1, %s295
      %s297 = smul.u32 4, %s18
      %s298 = smul.u32 4, %s18
      %p299 = scmp.lt.s32.totalorder %s298, 7
      %s300 = scalar_select %p299, %s298, 7
      %s301 = smul.addr %s300, 8
      %s302 = scalar_lea.vmem %s7, %s301
      %s303 = smul.u32 4, %s18
      %v304 = vld [vmem:[%s290] sm:$0xff]
      %v305 = vld [vmem:[%s290 + $0x8] sm:$0xff]
      %v306 = vld [vmem:[%s290 + $0x10] sm:$0xff]
      %v307 = vld [vmem:[%s290 + $0x18] sm:$0xff]
      %v308 = vld [vmem:[%s296] sm:$0xff]
      %v309 = vld [vmem:[%s296 + $0x8] sm:$0xff]
      %v310 = vld [vmem:[%s296 + $0x10] sm:$0xff]
      %v311 = vld [vmem:[%s296 + $0x18] sm:$0xff]
      %v312 = vld [vmem:[%s2] sm:$0xff]
      %v313 = vld [vmem:[%s2 + $0x8] sm:$0xff]
      %v314 = vld [vmem:[%s2 + $0x10] sm:$0xff]
      %v315 = vld [vmem:[%s2 + $0x18] sm:$0xff]
      %v316 = vld [vmem:[%s2 + $0x20] sm:$0xff]
      %v317 = vld [vmem:[%s2 + $0x28] sm:$0xff]
      %v318 = vld [vmem:[%s2 + $0x30] sm:$0xff]
      %v319 = vld [vmem:[%s2 + $0x38] sm:$0xff]
      %v320 = vld [vmem:[%s2 + $0x40] sm:$0xff]
      %v321 = vld [vmem:[%s2 + $0x48] sm:$0xff]
      %v322 = vld [vmem:[%s2 + $0x50] sm:$0xff]
      %v323 = vld [vmem:[%s2 + $0x58] sm:$0xff]
      %v324 = vld [vmem:[%s2 + $0x60] sm:$0xff]
      %v325 = vld [vmem:[%s2 + $0x68] sm:$0xff]
      %v326 = vld [vmem:[%s2 + $0x70] sm:$0xff]
      %v327 = vld [vmem:[%s2 + $0x78] sm:$0xff]
      %v328 = vld [vmem:[%s3] sm:$0xff]
      %v329 = vld [vmem:[%s3 + $0x8] sm:$0xff]
      %v330 = vld [vmem:[%s3 + $0x10] sm:$0xff]
      %v331 = vld [vmem:[%s3 + $0x18] sm:$0xff]
      %vm332 = vcmask 261120
      %v334 = vsel %vm332, %v308, 0
      %v337 = vsel %vm332, %v309, 0
      %v340 = vsel %vm332, %v310, 0
      %v343 = vsel %vm332, %v311, 0
      %345 = vmatprep.subr.mxu0 0.0
      %346 = vmatpush1.msra.mxu0 %v328
      %347 = vmatprep.subr.mxu0 0.0
      %348 = vmatpush1.msra.mxu0 %v329
      %349 = vmatprep.subr.mxu0 0.0
      %350 = vmatpush1.msra.mxu0 %v330
      %351 = vmatprep.subr.mxu0 0.0
      %352 = vmatpush1.msra.mxu0 %v331
      %353 = vmatprep.subr.mxu0 0.0
      %354 = vmatpush1.msra.mxu0 0.0
      %355 = vmatprep.subr.mxu0 0.0
      %356 = vmatpush1.msra.mxu0 0.0
      %357 = vmatprep.subr.mxu0 0.0
      %358 = vmatpush1.msra.mxu0 0.0
      %359 = vmatprep.subr.mxu0 0.0
      %360 = vmatpush1.msra.mxu0 0.0
      %361 = vmatprep.subr.mxu0 0.0
      %362 = vmatpush1.msra.mxu0 0.0
      %363 = vmatprep.subr.mxu0 0.0
      %364 = vmatpush1.msra.mxu0 0.0
      %365 = vmatprep.subr.mxu0 0.0
      %366 = vmatpush1.msra.mxu0 0.0
      %367 = vmatprep.subr.mxu0 0.0
      %368 = vmatpush1.msra.mxu0 0.0
      %369 = vmatprep.subr.mxu0 0.0
      %370 = vmatpush1.msra.mxu0 0.0
      %371 = vmatprep.subr.mxu0 0.0
      %372 = vmatpush1.msra.mxu0 0.0
      %373 = vmatprep.subr.mxu0 0.0
      %374 = vmatpush1.msra.mxu0 0.0
      %375 = vmatprep.subr.mxu0 0.0
      %376 = vmatpush1.msra.mxu0 0.0
      %377 = vmatprep.subr.mxu0 0.0
      %378 = vmatpush1.msra.mxu0 0.0
      %379 = vmatprep.subr.mxu0 0.0
      %380 = vmatpush1.msra.mxu0 0.0
      %381 = vmatprep.subr.mxu0 0.0
      %382 = vmatpush1.msra.mxu0 0.0
      %383 = vmatprep.subr.mxu0 0.0
      %384 = vmatpush1.msra.mxu0 0.0
      %385 = vmatprep.subr.mxu0 0.0
      %386 = vmatpush1.msra.mxu0 0.0
      %387 = vmatprep.subr.mxu0 0.0
      %388 = vmatpush1.msra.mxu0 0.0
      %389 = vmatprep.subr.mxu0 0.0
      %390 = vmatpush1.msra.mxu0 0.0
      %391 = vmatprep.subr.mxu0 0.0
      %392 = vmatpush1.msra.mxu0 0.0
      %393 = vmatprep.subr.mxu0 0.0
      %394 = vmatpush1.msra.mxu0 0.0
      %395 = vmatprep.subr.mxu0 0.0
      %396 = vmatpush1.msra.mxu0 0.0
      %397 = vmatprep.subr.mxu0 0.0
      %398 = vmatpush1.msra.mxu0 0.0
      %399 = vmatprep.subr.mxu0 0.0
      %400 = vmatpush1.msra.mxu0 0.0
      %401 = vmatprep.subr.mxu0 0.0
      %402 = vmatpush1.msra.mxu0 0.0
      %403 = vmatprep.subr.mxu0 0.0
      %404 = vmatpush1.msra.mxu0 0.0
      %405 = vmatprep.subr.mxu0 0.0
      %406 = vmatpush1.msra.mxu0 0.0
      %407 = vmatprep.subr.mxu0 0.0
      %408 = vmatpush1.msra.mxu0 0.0
      %409 = vmatprep.mubr.f32.mxu0 0.0
      %410 = vmatmul.mubr.f32.gmra.mrb[0].mxu0 %v334
      %v411 = vpop.f32.mrb[0].mxu0
      %v412 = vadd.f32 0.0, %v411
      %v413 = vpop.f32.mrb[0].mxu0
      %414 = vmatprep.mubr.f32.mxu0 0.0
      %415 = vmatmul.mubr.f32.gmra.mrb[0].mxu0 %v337
      %v416 = vpop.f32.mrb[0].mxu0
      %v417 = vadd.f32 0.0, %v416
      %v418 = vpop.f32.mrb[0].mxu0
      %419 = vmatprep.mubr.f32.mxu0 0.0
      %420 = vmatmul.mubr.f32.gmra.mrb[0].mxu0 %v340
      %v421 = vpop.f32.mrb[0].mxu0
      %v422 = vadd.f32 0.0, %v421
      %v423 = vpop.f32.mrb[0].mxu0
      %424 = vmatprep.mubr.f32.mxu0 0.0
      %425 = vmatmul.mubr.f32.gmra.mrb[0].mxu0 %v343
      %v426 = vpop.f32.mrb[0].mxu0
      %v427 = vadd.f32 0.0, %v426
      %v428 = vpop.f32.mrb[0].mxu0
      %429 = vdwg.mxu0
      %430 = vmatprep.subr.mxu0 0.0
      %431 = vmatpush1.msra.mxu0 %v312
      %432 = vmatprep.subr.mxu0 0.0
      %433 = vmatpush1.msra.mxu0 %v313
      %434 = vmatprep.subr.mxu0 0.0
      %435 = vmatpush1.msra.mxu0 %v314
      %436 = vmatprep.subr.mxu0 0.0
      %437 = vmatpush1.msra.mxu0 %v315
      %438 = vmatprep.subr.mxu0 0.0
      %439 = vmatpush1.msra.mxu0 %v316
      %440 = vmatprep.subr.mxu0 0.0
      %441 = vmatpush1.msra.mxu0 %v317
      %442 = vmatprep.subr.mxu0 0.0
      %443 = vmatpush1.msra.mxu0 %v318
      %444 = vmatprep.subr.mxu0 0.0
      %445 = vmatpush1.msra.mxu0 %v319
      %446 = vmatprep.subr.mxu0 0.0
      %447 = vmatpush1.msra.mxu0 %v320
      %448 = vmatprep.subr.mxu0 0.0
      %449 = vmatpush1.msra.mxu0 %v321
      %450 = vmatprep.subr.mxu0 0.0
      %451 = vmatpush1.msra.mxu0 %v322
      %452 = vmatprep.subr.mxu0 0.0
      %453 = vmatpush1.msra.mxu0 %v323
      %454 = vmatprep.subr.mxu0 0.0
      %455 = vmatpush1.msra.mxu0 %v324
      %456 = vmatprep.subr.mxu0 0.0
      %457 = vmatpush1.msra.mxu0 %v325
      %458 = vmatprep.subr.mxu0 0.0
      %459 = vmatpush1.msra.mxu0 %v326
      %460 = vmatprep.subr.mxu0 0.0
      %461 = vmatpush1.msra.mxu0 %v327
      %462 = vmatprep.subr.mxu0 0.0
      %463 = vmatpush1.msra.mxu0 0.0
      %464 = vmatprep.subr.mxu0 0.0
      %465 = vmatpush1.msra.mxu0 0.0
      %466 = vmatprep.subr.mxu0 0.0
      %467 = vmatpush1.msra.mxu0 0.0
      %468 = vmatprep.subr.mxu0 0.0
      %469 = vmatpush1.msra.mxu0 0.0
      %470 = vmatprep.subr.mxu0 0.0
      %471 = vmatpush1.msra.mxu0 0.0
      %472 = vmatprep.subr.mxu0 0.0
      %473 = vmatpush1.msra.mxu0 0.0
      %474 = vmatprep.subr.mxu0 0.0
      %475 = vmatpush1.msra.mxu0 0.0
      %476 = vmatprep.subr.mxu0 0.0
      %477 = vmatpush1.msra.mxu0 0.0
      %478 = vmatprep.subr.mxu0 0.0
      %479 = vmatpush1.msra.mxu0 0.0
      %480 = vmatprep.subr.mxu0 0.0
      %481 = vmatpush1.msra.mxu0 0.0
      %482 = vmatprep.subr.mxu0 0.0
      %483 = vmatpush1.msra.mxu0 0.0
      %484 = vmatprep.subr.mxu0 0.0
      %485 = vmatpush1.msra.mxu0 0.0
      %486 = vmatprep.subr.mxu0 0.0
      %487 = vmatpush1.msra.mxu0 0.0
      %488 = vmatprep.subr.mxu0 0.0
      %489 = vmatpush1.msra.mxu0 0.0
      %490 = vmatprep.subr.mxu0 0.0
      %491 = vmatpush1.msra.mxu0 0.0
      %492 = vmatprep.subr.mxu0 0.0
      %493 = vmatpush1.msra.mxu0 0.0
      %494 = vmatprep.mubr.f32.mxu0 0.0
      %495 = vmatmul.mubr.f32.gmra.mrb[0].mxu0 %v304
      %v496 = vpop.f32.mrb[0].mxu0
      %v497 = vadd.f32 %v412, %v496
      %v498 = vpop.f32.mrb[0].mxu0
      %499 = vmatprep.mubr.f32.mxu0 0.0
      %500 = vmatmul.mubr.f32.gmra.mrb[0].mxu0 %v305
      %v501 = vpop.f32.mrb[0].mxu0
      %v502 = vadd.f32 %v417, %v501
      %v503 = vpop.f32.mrb[0].mxu0
      %504 = vmatprep.mubr.f32.mxu0 0.0
      %505 = vmatmul.mubr.f32.gmra.mrb[0].mxu0 %v306
      %v506 = vpop.f32.mrb[0].mxu0
      %v507 = vadd.f32 %v422, %v506
      %v508 = vpop.f32.mrb[0].mxu0
      %509 = vmatprep.mubr.f32.mxu0 0.0
      %510 = vmatmul.mubr.f32.gmra.mrb[0].mxu0 %v307
      %v511 = vpop.f32.mrb[0].mxu0
      %v512 = vadd.f32 %v427, %v511
      %v513 = vpop.f32.mrb[0].mxu0
      %514 = vdwg.mxu0
      %v515 = vld [vmem:[%s4] sm:$0x1]
      %v517 = vlaneseq
      %v518 = vshrl.u32 %v517, 7
      %v519 = vsub.s32 0, %v518
      %v520 = vrot.slane %v515, %v519
      %v522 = vadd.f32 %v497, %v520
      %v523 = vadd.f32 %v502, %v520
      %v524 = vadd.f32 %v507, %v520
      %v525 = vadd.f32 %v512, %v520
      %v526 = vmul.f32 %v522, 0.5
      %v527 = vmul.f32 %v523, 0.5
      %v528 = vmul.f32 %v524, 0.5
      %v529 = vmul.f32 %v525, 0.5
      %v530 = vmul.f32 %v522, 0.044715
      %v531 = vmul.f32 %v523, 0.044715
      %v532 = vmul.f32 %v524, 0.044715
      %v533 = vmul.f32 %v525, 0.044715
      %v534 = vmul.f32 %v530, %v522
      %v535 = vmul.f32 %v531, %v523
      %v536 = vmul.f32 %v532, %v524
      %v537 = vmul.f32 %v533, %v525
      %v538 = vmul.f32 %v534, %v522
      %v539 = vmul.f32 %v535, %v523
      %v540 = vmul.f32 %v536, %v524
      %v541 = vmul.f32 %v537, %v525
      %v542 = vadd.f32 %v522, %v538
      %v543 = vadd.f32 %v523, %v539
      %v544 = vadd.f32 %v524, %v540
      %v545 = vadd.f32 %v525, %v541
      %v546 = vmul.f32 %v542, 0.7978846
      %v547 = vmul.f32 %v543, 0.7978846
      %v548 = vmul.f32 %v544, 0.7978846
      %v549 = vmul.f32 %v545, 0.7978846
      %v550 = vtanh.pop %v546
      %v551 = vtanh.pop %v547
      %v552 = vtanh.pop %v548
      %v553 = vtanh.pop %v549
      %v554 = vadd.f32 %v550, 1.0
      %v555 = vadd.f32 %v551, 1.0
      %v556 = vadd.f32 %v552, 1.0
      %v557 = vadd.f32 %v553, 1.0
      %v558 = vmul.f32 %v526, %v554
      %v559 = vmul.f32 %v527, %v555
      %v560 = vmul.f32 %v528, %v556
      %v561 = vmul.f32 %v529, %v557
      %v562 = vld [vmem:[%s5] sm:$0xff]
      %v563 = vld [vmem:[%s5 + $0x8] sm:$0xff]
      %v564 = vld [vmem:[%s5 + $0x10] sm:$0xff]
      %v565 = vld [vmem:[%s5 + $0x18] sm:$0xff]
      %v566 = vld [vmem:[%s5 + $0x20] sm:$0xff]
      %v567 = vld [vmem:[%s5 + $0x28] sm:$0xff]
      %v568 = vld [vmem:[%s5 + $0x30] sm:$0xff]
      %v569 = vld [vmem:[%s5 + $0x38] sm:$0xff]
      %v570 = vld [vmem:[%s5 + $0x40] sm:$0xff]
      %v571 = vld [vmem:[%s5 + $0x48] sm:$0xff]
      %v572 = vld [vmem:[%s5 + $0x50] sm:$0xff]
      %v573 = vld [vmem:[%s5 + $0x58] sm:$0xff]
      %v574 = vld [vmem:[%s5 + $0x60] sm:$0xff]
      %v575 = vld [vmem:[%s5 + $0x68] sm:$0xff]
      %v576 = vld [vmem:[%s5 + $0x70] sm:$0xff]
      %v577 = vld [vmem:[%s5 + $0x78] sm:$0xff]
      %v578 = vld [vmem:[%s6] sm:$0x1]
      %v580 = vlaneseq
      %v581 = vshrl.u32 %v580, 7
      %v582 = vsub.s32 0, %v581
      %v583 = vrot.slane %v578, %v582
      %585 = vmatprep.subr.mxu0 0.0
      %586 = vmatpush1.msra.mxu0 %v562
      %587 = vmatprep.subr.mxu0 0.0
      %588 = vmatpush1.msra.mxu0 %v563
      %589 = vmatprep.subr.mxu0 0.0
      %590 = vmatpush1.msra.mxu0 %v564
      %591 = vmatprep.subr.mxu0 0.0
      %592 = vmatpush1.msra.mxu0 %v565
      %593 = vmatprep.subr.mxu0 0.0
      %594 = vmatpush1.msra.mxu0 %v566
      %595 = vmatprep.subr.mxu0 0.0
      %596 = vmatpush1.msra.mxu0 %v567
      %597 = vmatprep.subr.mxu0 0.0
      %598 = vmatpush1.msra.mxu0 %v568
      %599 = vmatprep.subr.mxu0 0.0
      %600 = vmatpush1.msra.mxu0 %v569
      %601 = vmatprep.subr.mxu0 0.0
      %602 = vmatpush1.msra.mxu0 %v570
      %603 = vmatprep.subr.mxu0 0.0
      %604 = vmatpush1.msra.mxu0 %v571
      %605 = vmatprep.subr.mxu0 0.0
      %606 = vmatpush1.msra.mxu0 %v572
      %607 = vmatprep.subr.mxu0 0.0
      %608 = vmatpush1.msra.mxu0 %v573
      %609 = vmatprep.subr.mxu0 0.0
      %610 = vmatpush1.msra.mxu0 %v574
      %611 = vmatprep.subr.mxu0 0.0
      %612 = vmatpush1.msra.mxu0 %v575
      %613 = vmatprep.subr.mxu0 0.0
      %614 = vmatpush1.msra.mxu0 %v576
      %615 = vmatprep.subr.mxu0 0.0
      %616 = vmatpush1.msra.mxu0 %v577
      %617 = vmatprep.subr.mxu0 0.0
      %618 = vmatpush1.msra.mxu0 0.0
      %619 = vmatprep.subr.mxu0 0.0
      %620 = vmatpush1.msra.mxu0 0.0
      %621 = vmatprep.subr.mxu0 0.0
      %622 = vmatpush1.msra.mxu0 0.0
      %623 = vmatprep.subr.mxu0 0.0
      %624 = vmatpush1.msra.mxu0 0.0
      %625 = vmatprep.subr.mxu0 0.0
      %626 = vmatpush1.msra.mxu0 0.0
      %627 = vmatprep.subr.mxu0 0.0
      %628 = vmatpush1.msra.mxu0 0.0
      %629 = vmatprep.subr.mxu0 0.0
      %630 = vmatpush1.msra.mxu0 0.0
      %631 = vmatprep.subr.mxu0 0.0
      %632 = vmatpush1.msra.mxu0 0.0
      %633 = vmatprep.subr.mxu0 0.0
      %634 = vmatpush1.msra.mxu0 0.0
      %635 = vmatprep.subr.mxu0 0.0
      %636 = vmatpush1.msra.mxu0 0.0
      %637 = vmatprep.subr.mxu0 0.0
      %638 = vmatpush1.msra.mxu0 0.0
      %639 = vmatprep.subr.mxu0 0.0
      %640 = vmatpush1.msra.mxu0 0.0
      %641 = vmatprep.subr.mxu0 0.0
      %642 = vmatpush1.msra.mxu0 0.0
      %643 = vmatprep.subr.mxu0 0.0
      %644 = vmatpush1.msra.mxu0 0.0
      %645 = vmatprep.subr.mxu0 0.0
      %646 = vmatpush1.msra.mxu0 0.0
      %647 = vmatprep.subr.mxu0 0.0
      %648 = vmatpush1.msra.mxu0 0.0
      %649 = vmatprep.mubr.f32.mxu0 0.0
      %650 = vmatmul.mubr.f32.gmra.mrb[0].mxu0 %v558
      %v651 = vpop.f32.mrb[0].mxu0
      %v652 = vadd.f32 %v583, %v651
      %v653 = vpop.f32.mrb[0].mxu0
      %654 = vmatprep.mubr.f32.mxu0 0.0
      %655 = vmatmul.mubr.f32.gmra.mrb[0].mxu0 %v559
      %v656 = vpop.f32.mrb[0].mxu0
      %v657 = vadd.f32 %v583, %v656
      %v658 = vpop.f32.mrb[0].mxu0
      %659 = vmatprep.mubr.f32.mxu0 0.0
      %660 = vmatmul.mubr.f32.gmra.mrb[0].mxu0 %v560
      %v661 = vpop.f32.mrb[0].mxu0
      %v662 = vadd.f32 %v583, %v661
      %v663 = vpop.f32.mrb[0].mxu0
      %664 = vmatprep.mubr.f32.mxu0 0.0
      %665 = vmatmul.mubr.f32.gmra.mrb[0].mxu0 %v561
      %v666 = vpop.f32.mrb[0].mxu0
      %v667 = vadd.f32 %v583, %v666
      %v668 = vpop.f32.mrb[0].mxu0
      %669 = vdwg.mxu0
      %v670 = vmul.f32 %v652, %v308
      %v671 = vmul.f32 %v657, %v309
      %v672 = vmul.f32 %v662, %v310
      %v673 = vmul.f32 %v667, %v311
      %v674 = vsel %vm332, %v670, 0.0
      %675 = vadd.xlane.f32.xlu0 %v674
      %v676 = vpop.xlane.xlu0 %675
      %v677 = vsel %vm332, %v671, 0.0
      %678 = vadd.xlane.f32.xlu0 %v677
      %v679 = vpop.xlane.xlu0 %678
      %v680 = vsel %vm332, %v672, 0.0
      %681 = vadd.xlane.f32.xlu0 %v680
      %v682 = vpop.xlane.xlu0 %681
      %v683 = vsel %vm332, %v673, 0.0
      %684 = vadd.xlane.f32.xlu0 %v683
      %v685 = vpop.xlane.xlu0 %684
      %686 = vrot.lane.b32.xlu0 %v308, 32
      %v687 = vpop.permute.xlu0 %686
      %688 = vrot.lane.b32.xlu0 %v309, 32
      %v689 = vpop.permute.xlu0 %688
      %690 = vrot.lane.b32.xlu0 %v310, 32
      %v691 = vpop.permute.xlu0 %690
      %692 = vrot.lane.b32.xlu0 %v311, 32
      %v693 = vpop.permute.xlu0 %692
      %v698 = vmul.f32 %v652, %v687
      %v699 = vmul.f32 %v657, %v689
      %v700 = vmul.f32 %v662, %v691
      %v701 = vmul.f32 %v667, %v693
      %706 = vrot.lane.b32.xlu0 %v698, 96
      %v707 = vpop.permute.xlu0 %706
      %708 = vrot.lane.b32.xlu0 %v699, 96
      %v709 = vpop.permute.xlu0 %708
      %710 = vrot.lane.b32.xlu0 %v700, 96
      %v711 = vpop.permute.xlu0 %710
      %712 = vrot.lane.b32.xlu0 %v701, 96
      %v713 = vpop.permute.xlu0 %712
      %v718 = vsel %vm332, %v707, 0.0
      %719 = vadd.xlane.f32.xlu0 %v718
      %v720 = vpop.xlane.xlu0 %719
      %v721 = vsel %vm332, %v709, 0.0
      %722 = vadd.xlane.f32.xlu0 %v721
      %v723 = vpop.xlane.xlu0 %722
      %v724 = vsel %vm332, %v711, 0.0
      %725 = vadd.xlane.f32.xlu0 %v724
      %v726 = vpop.xlane.xlu0 %725
      %v727 = vsel %vm332, %v713, 0.0
      %728 = vadd.xlane.f32.xlu0 %v727
      %v729 = vpop.xlane.xlu0 %728
      %v730 = vlaneseq
      %v731 = vand.u32 %v730, 127
      %vm732 = vcmp.eq.s32.totalorder %v731, 0
      %v733 = vsel %vm732, %v676, %v720
      %v734 = vsel %vm732, %v679, %v723
      %v735 = vsel %vm732, %v682, %v726
      %v736 = vsel %vm732, %v685, %v729
      %vm737 = vcmask 15360
      %738 = vst.msk [vmem:[%s302] sm:$0xff] %vm737, %v733
      %739 = vst.msk [vmem:[%s302 + $0x8] sm:$0xff] %vm737, %v734
      %740 = vst.msk [vmem:[%s302 + $0x10] sm:$0xff] %vm737, %v735
      %741 = vst.msk [vmem:[%s302 + $0x18] sm:$0xff] %vm737, %v736
      %s742 = smul.u32 4, %s18
      %p743 = scmp.lt.s32.totalorder %s742, 7
      %s744 = scalar_select %p743, %s742, 7
      %s745 = smul.addr %s744, 8
      %s746 = scalar_lea.vmem %s7, %s745
      // Predicated region
      $region49: #{tpu_custom_call.1} parent=47 // pred_check
        %p747 = pneg %p193
      $region50: #{tpu_custom_call.1} parent=47 // pred_check_branch
        %749 = sbr.rel (%p747) target = $region52
      $region51: #{tpu_custom_call.1} parent=47 // pred_region
        %s750 = smul.u32 4, %s18
      $region52: #{tpu_custom_call.1} parent=47 // pred_fallthru
        _
    $region48: #{tpu_custom_call.1} parent=5 // pred_fallthru
      _
    %p751 = scmp.le.s32.totalorder 2, %s13
    // Predicated region
    $region53: #{tpu_custom_call.1} parent=5 // pred_check
      %p752 = pneg %p751
    $region54: #{tpu_custom_call.1} parent=5 // pred_check_branch
      %754 = sbr.rel (%p752) target = $region56
    $region55: #{tpu_custom_call.1} parent=5 // pred_region
      %s755 = ssub.s32 %s13, 2
      // Predicated region
      $region57: #{tpu_custom_call.1} parent=55 // pred_check
        %p756 = pneg %p199
      $region58: #{tpu_custom_call.1} parent=55 // pred_check_branch
        %758 = sbr.rel (%p756) target = $region60
      $region59: #{tpu_custom_call.1} parent=55 // pred_region
        %s759 = smul.u32 4, %s19
        %p760 = scmp.lt.s32.totalorder %s759, 7
        %s761 = scalar_select %p760, %s759, 7
        %s762 = smul.addr %s761, 8
        %s763 = scalar_lea.vmem %s7, %s762
      $region60: #{tpu_custom_call.1} parent=55 // pred_fallthru
        _
    $region56: #{tpu_custom_call.1} parent=5 // pred_fallthru
      _
  $region6: #{tpu_custom_call.1} parent=0 // loop_footer
    %s17 = sadd.s32 1, %s13
  $region7: #{tpu_custom_call.1} parent=0 // loop_footer_branch
    %12 = sbr.rel target = $region3
  $region8: #{tpu_custom_call.1} parent=0 // loop_exit
    _

</llo_original>
